<compile_context>
chip_gen: v7x
topology: tpu7x:2x2x1
jax: 0.10.0
libtpu: 0.0.40
codegen_flags: <defaults>
</compile_context>

<pallas_src>
import jax
import jax.numpy as jnp
from jax.experimental import pallas as pl
from jax.experimental.pallas import tpu as pltpu

EPS = 1e-5

# If a single tile would cover >= this many (8-padded) rows, split into 2 grid
# steps so the "parallel" batch axis can shard across v7x's 2 TensorCores.
_SPLIT_ROWS = 256


def _round_up(n, m):
    return ((n + m - 1) // m) * m


def _choose_tiling(batch, tb_max):
    """Pick (tile_rows, n_tiles, padded_rows) with a nearly-full last tile."""
    rows = _round_up(max(batch, 1), 8)
    tb_max = max(8, _round_up(tb_max, 8))
    n_tiles = -(-rows // tb_max)
    if n_tiles == 1 and rows >= _SPLIT_ROWS:
        n_tiles = 2  # keep both v7x TensorCores busy; negligible cost elsewhere
    tb = _round_up(-(-rows // n_tiles), 8)
    n_tiles = -(-rows // tb)
    return tb, n_tiles, tb * n_tiles


def _pack_slabs(ws, bs):
    """Pack weights/biases into two lane-padded f32 slabs (wrapper-side).

    Weight i lives at rows [w_offs[i], w_offs[i]+fan_in), cols [0, fan_out).
    Bias i lives at row 8*i (sublane-aligned), cols [0, fan_out).
    """
    lane_w = _round_up(max(w.shape[1] for w in ws), 128)

    w_offs, row = [], 0
    for w in ws:
        w_offs.append(row)
        row += _round_up(w.shape[0], 8)
    w_slab = jnp.zeros((row, lane_w), jnp.float32)
    for off, w in zip(w_offs, ws):
        w_slab = w_slab.at[off:off + w.shape[0], :w.shape[1]].set(w)

    b_offs = [8 * i for i in range(len(bs))]
    b_slab = jnp.zeros((8 * len(bs), lane_w), jnp.float32)
    for off, b in zip(b_offs, bs):
        b_slab = b_slab.at[off, :b.shape[1]].set(b[0])

    return w_slab, w_offs, b_slab, b_offs


def _make_kernel(layer_dims, w_offs, b_offs):
    """Fused 4-layer MLP on one (TB, F) batch tile; weights read from slabs."""
    n = len(layer_dims)

    def kernel(x_ref, w_ref, b_ref, o_ref):
        h = x_ref[...]
        for i, (fan_in, fan_out) in enumerate(layer_dims):
            w = w_ref[w_offs[i]:w_offs[i] + fan_in, 0:fan_out]   # static slice
            b = b_ref[b_offs[i]:b_offs[i] + 1, 0:fan_out]        # (1, fan_out)
            h = jnp.dot(h, w, preferred_element_type=jnp.float32) + b
            if i < n - 1:
                h = jnp.maximum(h, 0.0)
        o_ref[...] = h.astype(o_ref.dtype)

    return kernel


def wizard_forward(x, params, *, tb_max=4096):
    """Run WizardNN.forward (eval mode) via a single pallas_call.

    x: (B, input_size) float32
    params: dict of weights/biases/bn buffers (see init_params).
    """
    batch, input_size = x.shape
    use_bn = batch > 1  # PyTorch branch `if x.size(0) > 1` (static at trace time)

    # --- fold eval-mode BatchNorm into the preceding Linear (wrapper-side) ---
    ws, bs = [], []
    for i in range(1, 4):
        w, b = params[f"w{i}"], params[f"b{i}"]
        if use_bn:
            scale = params[f"g{i}"] * jax.lax.rsqrt(params[f"v{i}"] + EPS)  # (1, F)
            w = w * scale                                                   # (in, F)
            b = (b - params[f"m{i}"]) * scale + params[f"be{i}"]            # (1, F)
        ws.append(w)
        bs.append(b)
    ws.append(params["w4"])
    bs.append(params["b4"])

    layer_dims = [w.shape for w in ws]
    out_features = layer_dims[-1][1]

    # --- pack all weights / biases into two constant-index slabs ---
    w_slab, w_offs, b_slab, b_offs = _pack_slabs(ws, bs)

    # --- batch tiling: large tiles, nearly-full last tile, >=2 steps on v7x ---
    tb, n_tiles, padded = _choose_tiling(batch, tb_max)
    if padded != batch:
        x = jnp.pad(x, ((0, padded - batch), (0, 0)))

    kernel = _make_kernel(layer_dims, w_offs, b_offs)

    out = pl.pallas_call(
        kernel,
        out_shape=jax.ShapeDtypeStruct((padded, out_features), jnp.float32),
        grid=(n_tiles,),
        in_specs=[
            pl.BlockSpec((tb, input_size), lambda i: (i, 0)),   # streamed
            pl.BlockSpec(w_slab.shape, lambda i: (0, 0)),       # VMEM-resident
            pl.BlockSpec(b_slab.shape, lambda i: (0, 0)),       # VMEM-resident
        ],
        out_specs=pl.BlockSpec((tb, out_features), lambda i: (i, 0)),
        compiler_params=pltpu.CompilerParams(
            dimension_semantics=("parallel",),       # shards batch tiles on v7x 2-TC
            vmem_limit_bytes=32 * 1024 * 1024,       # fits v5e/v6e/v7x scoped budgets
        ),
    )(x, w_slab, b_slab)
    return out[:batch]


def init_params(key, input_size, hidden_size, output_size):
    """Deterministic init matching WizardNN.__init__ shapes.

    Linear weights: kaiming_normal_-style (gain=sqrt(2), fan_in), stored (in, out).
    Linear biases: U(-1/sqrt(fan_in), 1/sqrt(fan_in)).
    BatchNorm1d: weight=1, bias=0, running_mean=0, running_var=1.
    """
    dims = [input_size, hidden_size, hidden_size // 2, hidden_size // 4, output_size]
    params = {}
    keys = jax.random.split(key, 8)
    for i in range(4):
        fan_in, fan_out = dims[i], dims[i + 1]
        std = (2.0 / fan_in) ** 0.5
        w = std * jax.random.normal(keys[2 * i], (fan_in, fan_out), jnp.float32)
        bound = 1.0 / (fan_in ** 0.5)
        b = jax.random.uniform(
            keys[2 * i + 1], (1, fan_out), jnp.float32, minval=-bound, maxval=bound
        )
        params[f"w{i + 1}"] = w
        params[f"b{i + 1}"] = b
        if i < 3:  # bn1 / bn2 / bn3
            params[f"g{i + 1}"] = jnp.ones((1, fan_out), jnp.float32)
            params[f"be{i + 1}"] = jnp.zeros((1, fan_out), jnp.float32)
            params[f"m{i + 1}"] = jnp.zeros((1, fan_out), jnp.float32)
            params[f"v{i + 1}"] = jnp.ones((1, fan_out), jnp.float32)
    return params


def reference_forward(x, params, use_bn):
    """Plain-JAX reference (unfolded BN) for correctness check."""
    h = x
    for i in range(1, 4):
        h = h @ params[f"w{i}"] + params[f"b{i}"]
        if use_bn:
            h = (h - params[f"m{i}"]) * jax.lax.rsqrt(params[f"v{i}"] + EPS) \
                * params[f"g{i}"] + params[f"be{i}"]
        h = jnp.maximum(h, 0.0)
    return h @ params["w4"] + params["b4"]


if __name__ == "__main__":
    key = jax.random.PRNGKey(0)
    k_params, k_x = jax.random.split(key)

    # Forward-consistent shapes: input=16, hidden=32, output=4.
    input_size, hidden_size, output_size = 16, 32, 4
    params = init_params(k_params, input_size, hidden_size, output_size)

    # Case 1: batch > 1 -> BN branch (folded into linear), single small tile.
    batch = 2
    x = jax.random.normal(k_x, (batch, input_size), jnp.float32)
    out = jax.block_until_ready(wizard_forward(x, params))
    ref = reference_forward(x, params, use_bn=True)
    assert out.shape == (batch, output_size)
    assert jnp.allclose(out, ref, atol=1e-4, rtol=1e-4), (out, ref)

    # Case 2: batch == 1 -> no-BN branch (PyTorch `x.size(0) > 1` check).
    x1 = x[:1]
    out1 = jax.block_until_ready(wizard_forward(x1, params))
    ref1 = reference_forward(x1, params, use_bn=False)
    assert jnp.allclose(out1, ref1, atol=1e-4, rtol=1e-4), (out1, ref1)

    # Case 3: batch=260 -> split into 2 nearly-full tiles (272 padded rows),
    # exercising the multi-tile grid + padding + "parallel" axis path.
    xb = jax.random.normal(jax.random.PRNGKey(3), (260, input_size), jnp.float32)
    outb = jax.block_until_ready(wizard_forward(xb, params))
    refb = reference_forward(xb, params, use_bn=True)
    assert outb.shape == (260, output_size)
    assert jnp.allclose(outb, refb, atol=1e-4, rtol=1e-4)

    # Case 4: larger batch exercising a big (>512-row) tile per grid step.
    xc = jax.random.normal(jax.random.PRNGKey(4), (1500, input_size), jnp.float32)
    outc = jax.block_until_ready(wizard_forward(xc, params))
    refc = reference_forward(xc, params, use_bn=True)
    assert outc.shape == (1500, output_size)
    assert jnp.allclose(outc, refc, atol=1e-4, rtol=1e-4)

    print("KERNEL_OK")
</pallas_src>

<mosaic_0001>
module attributes {stable_mosaic.version = 11 : i64} {
  func.func @kernel(%arg0: i32, %arg1: memref<8x16xf32, #tpu.memory_space<vmem>>, %arg2: memref<72x128xf32, #tpu.memory_space<vmem>>, %arg3: memref<32x128xf32, #tpu.memory_space<vmem>>, %arg4: memref<8x4xf32, #tpu.memory_space<vmem>>) attributes {dimension_semantics = [#tpu.dimension_semantics<parallel>], iteration_bounds = array<i64: 1>, scalar_prefetch = 0 : i64, scratch_operands = 0 : i64, tpu.core_type = #tpu.core_type<tc>, window_params = [{transform_indices = @transform_0, window_bounds = array<i64: 8, 16>}, {pipeline_mode = #tpu.pipeline_mode<synchronous>, transform_indices = @transform_1, window_bounds = array<i64: 72, 128>}, {pipeline_mode = #tpu.pipeline_mode<synchronous>, transform_indices = @transform_2, window_bounds = array<i64: 32, 128>}, {transform_indices = @transform_3, window_bounds = array<i64: 8, 4>}]} {
    %c0 = arith.constant 0 : index
    %c0_0 = arith.constant 0 : index
    %0 = vector.load %arg1[%c0, %c0_0] : memref<8x16xf32, #tpu.memory_space<vmem>>, vector<8x16xf32>
    %c0_1 = arith.constant 0 : index
    %c0_2 = arith.constant 0 : index
    %1 = vector.load %arg2[%c0_1, %c0_2] : memref<72x128xf32, #tpu.memory_space<vmem>>, vector<16x32xf32>
    %c0_3 = arith.constant 0 : index
    %c0_4 = arith.constant 0 : index
    %2 = vector.load %arg3[%c0_3, %c0_4] : memref<32x128xf32, #tpu.memory_space<vmem>>, vector<1x32xf32>
    %cst = arith.constant dense<0.000000e+00> : vector<8x32xf32>
    %3 = tpu.matmul %0, %1, %cst {dimension_numbers = #tpu.dot_dimension_numbers<[1], [0], [0], [1], [0, 0, 1, 1], [], []>} : vector<8x16xf32>, vector<16x32xf32>, vector<8x32xf32> -> vector<8x32xf32>
    %4 = vector.broadcast %2 : vector<1x32xf32> to vector<8x32xf32>
    %5 = arith.addf %3, %4 : vector<8x32xf32>
    %cst_5 = arith.constant 0.000000e+00 : f32
    %6 = vector.broadcast %cst_5 : f32 to vector<8x32xf32>
    %7 = arith.maximumf %5, %6 : vector<8x32xf32>
    %c16 = arith.constant 16 : index
    %c0_6 = arith.constant 0 : index
    %8 = vector.load %arg2[%c16, %c0_6] : memref<72x128xf32, #tpu.memory_space<vmem>>, vector<32x16xf32>
    %c8 = arith.constant 8 : index
    %c0_7 = arith.constant 0 : index
    %9 = vector.load %arg3[%c8, %c0_7] : memref<32x128xf32, #tpu.memory_space<vmem>>, vector<1x16xf32>
    %cst_8 = arith.constant dense<0.000000e+00> : vector<8x16xf32>
    %10 = tpu.matmul %7, %8, %cst_8 {dimension_numbers = #tpu.dot_dimension_numbers<[1], [0], [0], [1], [0, 0, 1, 1], [], []>} : vector<8x32xf32>, vector<32x16xf32>, vector<8x16xf32> -> vector<8x16xf32>
    %11 = vector.broadcast %9 : vector<1x16xf32> to vector<8x16xf32>
    %12 = arith.addf %10, %11 : vector<8x16xf32>
    %cst_9 = arith.constant 0.000000e+00 : f32
    %13 = vector.broadcast %cst_9 : f32 to vector<8x16xf32>
    %14 = arith.maximumf %12, %13 : vector<8x16xf32>
    %c48 = arith.constant 48 : index
    %c0_10 = arith.constant 0 : index
    %15 = vector.load %arg2[%c48, %c0_10] : memref<72x128xf32, #tpu.memory_space<vmem>>, vector<16x8xf32>
    %c16_11 = arith.constant 16 : index
    %c0_12 = arith.constant 0 : index
    %16 = vector.load %arg3[%c16_11, %c0_12] : memref<32x128xf32, #tpu.memory_space<vmem>>, vector<1x8xf32>
    %cst_13 = arith.constant dense<0.000000e+00> : vector<8x8xf32>
    %17 = tpu.matmul %14, %15, %cst_13 {dimension_numbers = #tpu.dot_dimension_numbers<[1], [0], [0], [1], [0, 0, 1, 1], [], []>} : vector<8x16xf32>, vector<16x8xf32>, vector<8x8xf32> -> vector<8x8xf32>
    %18 = vector.broadcast %16 : vector<1x8xf32> to vector<8x8xf32>
    %19 = arith.addf %17, %18 : vector<8x8xf32>
    %cst_14 = arith.constant 0.000000e+00 : f32
    %20 = vector.broadcast %cst_14 : f32 to vector<8x8xf32>
    %21 = arith.maximumf %19, %20 : vector<8x8xf32>
    %c64 = arith.constant 64 : index
    %c0_15 = arith.constant 0 : index
    %22 = vector.load %arg2[%c64, %c0_15] : memref<72x128xf32, #tpu.memory_space<vmem>>, vector<8x4xf32>
    %c24 = arith.constant 24 : index
    %c0_16 = arith.constant 0 : index
    %23 = vector.load %arg3[%c24, %c0_16] : memref<32x128xf32, #tpu.memory_space<vmem>>, vector<1x4xf32>
    %cst_17 = arith.constant dense<0.000000e+00> : vector<8x4xf32>
    %24 = tpu.matmul %21, %22, %cst_17 {dimension_numbers = #tpu.dot_dimension_numbers<[1], [0], [0], [1], [0, 0, 1, 1], [], []>} : vector<8x8xf32>, vector<8x4xf32>, vector<8x4xf32> -> vector<8x4xf32>
    %25 = vector.broadcast %23 : vector<1x4xf32> to vector<8x4xf32>
    %26 = arith.addf %24, %25 : vector<8x4xf32>
    %c0_18 = arith.constant 0 : index
    %c0_19 = arith.constant 0 : index
    %27 = vector.load %arg4[%c0_18, %c0_19] : memref<8x4xf32, #tpu.memory_space<vmem>>, vector<8x4xf32>
    tpu.vector_store %arg4[%c0_18, %c0_19], %26 {strides = array<i32>} : memref<8x4xf32, #tpu.memory_space<vmem>>, vector<8x4xf32>,
    return
  }
  func.func @transform_0(%arg0: i32) -> (i32, i32) {
    %c0_i32 = arith.constant 0 : i32
    %c0_i32_0 = arith.constant 0 : i32
    return %arg0, %c0_i32 : i32, i32
  }
  func.func @transform_1(%arg0: i32) -> (i32, i32) {
    %c0_i32 = arith.constant 0 : i32
    %c0_i32_0 = arith.constant 0 : i32
    %c0_i32_1 = arith.constant 0 : i32
    return %c0_i32, %c0_i32_0 : i32, i32
  }
  func.func @transform_2(%arg0: i32) -> (i32, i32) {
    %c0_i32 = arith.constant 0 : i32
    %c0_i32_0 = arith.constant 0 : i32
    %c0_i32_1 = arith.constant 0 : i32
    return %c0_i32, %c0_i32_0 : i32, i32
  }
  func.func @transform_3(%arg0: i32) -> (i32, i32) {
    %c0_i32 = arith.constant 0 : i32
    %c0_i32_0 = arith.constant 0 : i32
    return %arg0, %c0_i32 : i32, i32
  }
}

</mosaic_0001>

<llo_original>
// kernel: tpu_custom_call.1
$region0: #{tpu_custom_call.1}
  #allocation0 [shape = 'u32[]', space=smem, size = 0x4, offset = 0x4, fixed_abs, tag = 'smem constant byte address 0x4 - core index']
  #allocation1 [shape = 'u32[144,128]{1,0:T(1,128)}', space=vmem, size = 0x12000, scoped, tag = 'internal scratch']
  %s0 = inlined_call_operand.hbm [shape: f32[8,16], index: 0, kind: input, shape index: {}]
  %s1 = inlined_call_operand.hbm [shape: f32[72,128], index: 1, kind: input, shape index: {}]
  %s2 = inlined_call_operand.hbm [shape: f32[32,128], index: 2, kind: input, shape index: {}]
  %s3 = inlined_call_operand.vmem [shape: f32[8,4], index: 3, kind: output, shape index: {}]
  %s4 = sld [smem:[#allocation0]]
  $region34: #{tpu_custom_call.1} parent=0
    _
  %s6 = ssub.s32 1, %s4
  %s7 = scalar_select 0, %s6, %s4
  $region1: #{tpu_custom_call.1} parent=0
    #allocation2 [shape = 'u8[4096]{0}', space=vmem, size = 0x1000, scoped, tag = 'input window, operand 0, single buffered']
    #allocation3 [shape = 's32[1]{0}', space=sflag, size = 0x4, scoped, tag = 'scoped memory for tpu_custom_call.1']
    #allocation4 [shape = 'u8[36864]{0}', space=vmem, size = 0x9000, scoped, tag = 'input window, operand 1, single buffered']
    #allocation5 [shape = 's32[1]{0}', space=sflag, size = 0x4, scoped, tag = 'scoped memory for tpu_custom_call.1']
    #allocation6 [shape = 'u8[16384]{0}', space=vmem, size = 0x4000, scoped, tag = 'input window, operand 2, single buffered']
    %8 = vsyncpa [#allocation3], 0
    %9 = vsyncpa [#allocation5], 0
    // Predicated region
    $region2: #{tpu_custom_call.1} parent=1 // pred_check
      _
    $region3: #{tpu_custom_call.1} parent=1 // pred_check_branch
      %11 = sbr.rel (0) target = $region5
    $region4: #{tpu_custom_call.1} parent=1 // pred_region
      %s13 = ssub.s32 128, 128
      %14 = vsyncadd [#allocation3], %s13
      %s16 = sshll.u32 [#allocation2], 4
      %s17 = int_to_ptr.vmem [resolvable:$true] %s16
      %19 = dma.hbm_to_vmem [thread:$0]  %s0, 128, %s17, [#allocation3]
    $region5: #{tpu_custom_call.1} parent=1 // pred_fallthru
      _
    // Predicated region
    $region6: #{tpu_custom_call.1} parent=1 // pred_check
      _
    $region7: #{tpu_custom_call.1} parent=1 // pred_check_branch
      %21 = sbr.rel (0) target = $region9
    $region8: #{tpu_custom_call.1} parent=1 // pred_region
      %s23 = ssub.s32 1152, 1152
      %24 = vsyncadd [#allocation5], %s23
      %s25 = sshll.u32 [#allocation4], 4
      %s26 = int_to_ptr.vmem [resolvable:$true] %s25
      %31 = dma.hbm_to_vmem [thread:$0]  %s1, 1152, %s26, [#allocation5], 128, 128, 8
    $region9: #{tpu_custom_call.1} parent=1 // pred_fallthru
      _
    // Predicated region
    $region10: #{tpu_custom_call.1} parent=1 // pred_check
      _
    $region11: #{tpu_custom_call.1} parent=1 // pred_check_branch
      %33 = sbr.rel (0) target = $region13
    $region12: #{tpu_custom_call.1} parent=1 // pred_region
      %s35 = ssub.s32 512, 512
      %36 = vsyncadd [#allocation5], %s35
      %s37 = sshll.u32 [#allocation6], 4
      %s38 = int_to_ptr.vmem [resolvable:$true] %s37
      %43 = dma.hbm_to_vmem [thread:$0]  %s2, 512, %s38, [#allocation5], 128, 128, 8
    $region13: #{tpu_custom_call.1} parent=1 // pred_fallthru
      _
    // Predicated region
    $region14: #{tpu_custom_call.1} parent=1 // pred_check
      _
    $region15: #{tpu_custom_call.1} parent=1 // pred_check_branch
      %45 = sbr.rel (0) target = $region17
    $region16: #{tpu_custom_call.1} parent=1 // pred_region
      %46 = dma.done [#allocation3], 128
    $region17: #{tpu_custom_call.1} parent=1 // pred_fallthru
      _
    // Predicated region
    $region18: #{tpu_custom_call.1} parent=1 // pred_check
      _
    $region19: #{tpu_custom_call.1} parent=1 // pred_check_branch
      %48 = sbr.rel (0) target = $region21
    $region20: #{tpu_custom_call.1} parent=1 // pred_region
      %49 = dma.done [#allocation5], 1152
    $region21: #{tpu_custom_call.1} parent=1 // pred_fallthru
      _
    // Predicated region
    $region22: #{tpu_custom_call.1} parent=1 // pred_check
      _
    $region23: #{tpu_custom_call.1} parent=1 // pred_check_branch
      %51 = sbr.rel (0) target = $region25
    $region24: #{tpu_custom_call.1} parent=1 // pred_region
      %52 = dma.done [#allocation5], 512
    $region25: #{tpu_custom_call.1} parent=1 // pred_fallthru
      _
    %v53 = vld [vmem:[#allocation2] sm:$0xff]
    %v54 = vld [vmem:[#allocation4] sm:$0xff]
    %v55 = vld [vmem:[#allocation4 + $0x8] sm:$0xff]
    %v56 = vld [vmem:[#allocation6] sm:$0x1]
    %v57 = vlaneseq
    %v58 = vshrl.u32 %v57, 7
    %v59 = vsub.s32 0, %v58
    %v60 = vrot.slane %v56, %v59
    %vm61 = vcmask 130048
    %v63 = vsel %vm61, %v53, 0
    %65 = vmatprep.subr.mxu0 0.0
    %66 = vmatpush1.msra.mxu0 %v54
    %67 = vmatprep.subr.mxu0 0.0
    %68 = vmatpush1.msra.mxu0 %v55
    %69 = vmatprep.subr.mxu0 0.0
    %70 = vmatpush1.msra.mxu0 0.0
    %71 = vmatprep.subr.mxu0 0.0
    %72 = vmatpush1.msra.mxu0 0.0
    %73 = vmatprep.subr.mxu0 0.0
    %74 = vmatpush1.msra.mxu0 0.0
    %75 = vmatprep.subr.mxu0 0.0
    %76 = vmatpush1.msra.mxu0 0.0
    %77 = vmatprep.subr.mxu0 0.0
    %78 = vmatpush1.msra.mxu0 0.0
    %79 = vmatprep.subr.mxu0 0.0
    %80 = vmatpush1.msra.mxu0 0.0
    %81 = vmatprep.subr.mxu0 0.0
    %82 = vmatpush1.msra.mxu0 0.0
    %83 = vmatprep.subr.mxu0 0.0
    %84 = vmatpush1.msra.mxu0 0.0
    %85 = vmatprep.subr.mxu0 0.0
    %86 = vmatpush1.msra.mxu0 0.0
    %87 = vmatprep.subr.mxu0 0.0
    %88 = vmatpush1.msra.mxu0 0.0
    %89 = vmatprep.subr.mxu0 0.0
    %90 = vmatpush1.msra.mxu0 0.0
    %91 = vmatprep.subr.mxu0 0.0
    %92 = vmatpush1.msra.mxu0 0.0
    %93 = vmatprep.subr.mxu0 0.0
    %94 = vmatpush1.msra.mxu0 0.0
    %95 = vmatprep.subr.mxu0 0.0
    %96 = vmatpush1.msra.mxu0 0.0
    %97 = vmatprep.subr.mxu0 0.0
    %98 = vmatpush1.msra.mxu0 0.0
    %99 = vmatprep.subr.mxu0 0.0
    %100 = vmatpush1.msra.mxu0 0.0
    %101 = vmatprep.subr.mxu0 0.0
    %102 = vmatpush1.msra.mxu0 0.0
    %103 = vmatprep.subr.mxu0 0.0
    %104 = vmatpush1.msra.mxu0 0.0
    %105 = vmatprep.subr.mxu0 0.0
    %106 = vmatpush1.msra.mxu0 0.0
    %107 = vmatprep.subr.mxu0 0.0
    %108 = vmatpush1.msra.mxu0 0.0
    %109 = vmatprep.subr.mxu0 0.0
    %110 = vmatpush1.msra.mxu0 0.0
    %111 = vmatprep.subr.mxu0 0.0
    %112 = vmatpush1.msra.mxu0 0.0
    %113 = vmatprep.subr.mxu0 0.0
    %114 = vmatpush1.msra.mxu0 0.0
    %115 = vmatprep.subr.mxu0 0.0
    %116 = vmatpush1.msra.mxu0 0.0
    %117 = vmatprep.subr.mxu0 0.0
    %118 = vmatpush1.msra.mxu0 0.0
    %119 = vmatprep.subr.mxu0 0.0
    %120 = vmatpush1.msra.mxu0 0.0
    %121 = vmatprep.subr.mxu0 0.0
    %122 = vmatpush1.msra.mxu0 0.0
    %123 = vmatprep.subr.mxu0 0.0
    %124 = vmatpush1.msra.mxu0 0.0
    %125 = vmatprep.subr.mxu0 0.0
    %126 = vmatpush1.msra.mxu0 0.0
    %127 = vmatprep.subr.mxu0 0.0
    %128 = vmatpush1.msra.mxu0 0.0
    %129 = vmatprep.mubr.f32.mxu0 0.0
    %130 = vmatmul.mubr.f32.gmra.mrb[0].mxu0 %v63
    %v131 = vpop.f32.mrb[0].mxu0
    %v132 = vadd.f32 %v60, %v131
    %v133 = vpop.f32.mrb[0].mxu0
    %134 = vdwg.mxu0
    %v135 = vmax.f32 %v132, 0.0
    %v136 = vld [vmem:[#allocation4 + $0x10] sm:$0xff]
    %v137 = vld [vmem:[#allocation4 + $0x18] sm:$0xff]
    %v138 = vld [vmem:[#allocation4 + $0x20] sm:$0xff]
    %v139 = vld [vmem:[#allocation4 + $0x28] sm:$0xff]
    %v140 = vld [vmem:[#allocation6 + $0x8] sm:$0x1]
    %v141 = vlaneseq
    %v142 = vshrl.u32 %v141, 7
    %v143 = vsub.s32 0, %v142
    %v144 = vrot.slane %v140, %v143
    %vm145 = vcmask 261120
    %v147 = vsel %vm145, %v135, 0
    %149 = vmatprep.subr.mxu0 0.0
    %150 = vmatpush1.msra.mxu0 %v136
    %151 = vmatprep.subr.mxu0 0.0
    %152 = vmatpush1.msra.mxu0 %v137
    %153 = vmatprep.subr.mxu0 0.0
    %154 = vmatpush1.msra.mxu0 %v138
    %155 = vmatprep.subr.mxu0 0.0
    %156 = vmatpush1.msra.mxu0 %v139
    %157 = vmatprep.subr.mxu0 0.0
    %158 = vmatpush1.msra.mxu0 0.0
    %159 = vmatprep.subr.mxu0 0.0
    %160 = vmatpush1.msra.mxu0 0.0
    %161 = vmatprep.subr.mxu0 0.0
    %162 = vmatpush1.msra.mxu0 0.0
    %163 = vmatprep.subr.mxu0 0.0
    %164 = vmatpush1.msra.mxu0 0.0
    %165 = vmatprep.subr.mxu0 0.0
    %166 = vmatpush1.msra.mxu0 0.0
    %167 = vmatprep.subr.mxu0 0.0
    %168 = vmatpush1.msra.mxu0 0.0
    %169 = vmatprep.subr.mxu0 0.0
    %170 = vmatpush1.msra.mxu0 0.0
    %171 = vmatprep.subr.mxu0 0.0
    %172 = vmatpush1.msra.mxu0 0.0
    %173 = vmatprep.subr.mxu0 0.0
    %174 = vmatpush1.msra.mxu0 0.0
    %175 = vmatprep.subr.mxu0 0.0
    %176 = vmatpush1.msra.mxu0 0.0
    %177 = vmatprep.subr.mxu0 0.0
    %178 = vmatpush1.msra.mxu0 0.0
    %179 = vmatprep.subr.mxu0 0.0
    %180 = vmatpush1.msra.mxu0 0.0
    %181 = vmatprep.subr.mxu0 0.0
    %182 = vmatpush1.msra.mxu0 0.0
    %183 = vmatprep.subr.mxu0 0.0
    %184 = vmatpush1.msra.mxu0 0.0
    %185 = vmatprep.subr.mxu0 0.0
    %186 = vmatpush1.msra.mxu0 0.0
    %187 = vmatprep.subr.mxu0 0.0
    %188 = vmatpush1.msra.mxu0 0.0
    %189 = vmatprep.subr.mxu0 0.0
    %190 = vmatpush1.msra.mxu0 0.0
    %191 = vmatprep.subr.mxu0 0.0
    %192 = vmatpush1.msra.mxu0 0.0
    %193 = vmatprep.subr.mxu0 0.0
    %194 = vmatpush1.msra.mxu0 0.0
    %195 = vmatprep.subr.mxu0 0.0
    %196 = vmatpush1.msra.mxu0 0.0
    %197 = vmatprep.subr.mxu0 0.0
    %198 = vmatpush1.msra.mxu0 0.0
    %199 = vmatprep.subr.mxu0 0.0
    %200 = vmatpush1.msra.mxu0 0.0
    %201 = vmatprep.subr.mxu0 0.0
    %202 = vmatpush1.msra.mxu0 0.0
    %203 = vmatprep.subr.mxu0 0.0
    %204 = vmatpush1.msra.mxu0 0.0
    %205 = vmatprep.subr.mxu0 0.0
    %206 = vmatpush1.msra.mxu0 0.0
    %207 = vmatprep.subr.mxu0 0.0
    %208 = vmatpush1.msra.mxu0 0.0
    %209 = vmatprep.subr.mxu0 0.0
    %210 = vmatpush1.msra.mxu0 0.0
    %211 = vmatprep.subr.mxu0 0.0
    %212 = vmatpush1.msra.mxu0 0.0
    %213 = vmatprep.mubr.f32.mxu0 0.0
    %214 = vmatmul.mubr.f32.gmra.mrb[0].mxu0 %v147
    %v215 = vpop.f32.mrb[0].mxu0
    %v216 = vadd.f32 %v144, %v215
    %v217 = vpop.f32.mrb[0].mxu0
    %218 = vdwg.mxu0
    %v219 = vmax.f32 %v216, 0.0
    %v220 = vld [vmem:[#allocation4 + $0x30] sm:$0xff]
    %v221 = vld [vmem:[#allocation4 + $0x38] sm:$0xff]
    %v222 = vld [vmem:[#allocation6 + $0x10] sm:$0x1]
    %v223 = vlaneseq
    %v224 = vshrl.u32 %v223, 7
    %v225 = vsub.s32 0, %v224
    %v226 = vrot.slane %v222, %v225
    %v228 = vsel %vm61, %v219, 0
    %230 = vmatprep.subr.mxu0 0.0
    %231 = vmatpush1.msra.mxu0 %v220
    %232 = vmatprep.subr.mxu0 0.0
    %233 = vmatpush1.msra.mxu0 %v221
    %234 = vmatprep.subr.mxu0 0.0
    %235 = vmatpush1.msra.mxu0 0.0
    %236 = vmatprep.subr.mxu0 0.0
    %237 = vmatpush1.msra.mxu0 0.0
    %238 = vmatprep.subr.mxu0 0.0
    %239 = vmatpush1.msra.mxu0 0.0
    %240 = vmatprep.subr.mxu0 0.0
    %241 = vmatpush1.msra.mxu0 0.0
    %242 = vmatprep.subr.mxu0 0.0
    %243 = vmatpush1.msra.mxu0 0.0
    %244 = vmatprep.subr.mxu0 0.0
    %245 = vmatpush1.msra.mxu0 0.0
    %246 = vmatprep.subr.mxu0 0.0
    %247 = vmatpush1.msra.mxu0 0.0
    %248 = vmatprep.subr.mxu0 0.0
    %249 = vmatpush1.msra.mxu0 0.0
    %250 = vmatprep.subr.mxu0 0.0
    %251 = vmatpush1.msra.mxu0 0.0
    %252 = vmatprep.subr.mxu0 0.0
    %253 = vmatpush1.msra.mxu0 0.0
    %254 = vmatprep.subr.mxu0 0.0
    %255 = vmatpush1.msra.mxu0 0.0
    %256 = vmatprep.subr.mxu0 0.0
    %257 = vmatpush1.msra.mxu0 0.0
    %258 = vmatprep.subr.mxu0 0.0
    %259 = vmatpush1.msra.mxu0 0.0
    %260 = vmatprep.subr.mxu0 0.0
    %261 = vmatpush1.msra.mxu0 0.0
    %262 = vmatprep.subr.mxu0 0.0
    %263 = vmatpush1.msra.mxu0 0.0
    %264 = vmatprep.subr.mxu0 0.0
    %265 = vmatpush1.msra.mxu0 0.0
    %266 = vmatprep.subr.mxu0 0.0
    %267 = vmatpush1.msra.mxu0 0.0
    %268 = vmatprep.subr.mxu0 0.0
    %269 = vmatpush1.msra.mxu0 0.0
    %270 = vmatprep.subr.mxu0 0.0
    %271 = vmatpush1.msra.mxu0 0.0
    %272 = vmatprep.subr.mxu0 0.0
    %273 = vmatpush1.msra.mxu0 0.0
    %274 = vmatprep.subr.mxu0 0.0
    %275 = vmatpush1.msra.mxu0 0.0
    %276 = vmatprep.subr.mxu0 0.0
    %277 = vmatpush1.msra.mxu0 0.0
    %278 = vmatprep.subr.mxu0 0.0
    %279 = vmatpush1.msra.mxu0 0.0
    %280 = vmatprep.subr.mxu0 0.0
    %281 = vmatpush1.msra.mxu0 0.0
    %282 = vmatprep.subr.mxu0 0.0
    %283 = vmatpush1.msra.mxu0 0.0
    %284 = vmatprep.subr.mxu0 0.0
    %285 = vmatpush1.msra.mxu0 0.0
    %286 = vmatprep.subr.mxu0 0.0
    %287 = vmatpush1.msra.mxu0 0.0
    %288 = vmatprep.subr.mxu0 0.0
    %289 = vmatpush1.msra.mxu0 0.0
    %290 = vmatprep.subr.mxu0 0.0
    %291 = vmatpush1.msra.mxu0 0.0
    %292 = vmatprep.subr.mxu0 0.0
    %293 = vmatpush1.msra.mxu0 0.0
    %294 = vmatprep.mubr.f32.mxu0 0.0
    %295 = vmatmul.mubr.f32.gmra.mrb[0].mxu0 %v228
    %v296 = vpop.f32.mrb[0].mxu0
    %v297 = vadd.f32 %v226, %v296
    %v298 = vpop.f32.mrb[0].mxu0
    %299 = vdwg.mxu0
    %v300 = vmax.f32 %v297, 0.0
    %v301 = vld [vmem:[#allocation4 + $0x40] sm:$0xff]
    %v302 = vld [vmem:[#allocation6 + $0x18] sm:$0x1]
    %v303 = vlaneseq
    %v304 = vshrl.u32 %v303, 7
    %v305 = vsub.s32 0, %v304
    %v306 = vrot.slane %v302, %v305
    %vm307 = vcmask 64512
    %v309 = vsel %vm307, %v300, 0
    %311 = vmatprep.subr.mxu0 0.0
    %312 = vmatpush1.msra.mxu0 %v301
    %313 = vmatprep.subr.mxu0 0.0
    %314 = vmatpush1.msra.mxu0 0.0
    %315 = vmatprep.subr.mxu0 0.0
    %316 = vmatpush1.msra.mxu0 0.0
    %317 = vmatprep.subr.mxu0 0.0
    %318 = vmatpush1.msra.mxu0 0.0
    %319 = vmatprep.subr.mxu0 0.0
    %320 = vmatpush1.msra.mxu0 0.0
    %321 = vmatprep.subr.mxu0 0.0
    %322 = vmatpush1.msra.mxu0 0.0
    %323 = vmatprep.subr.mxu0 0.0
    %324 = vmatpush1.msra.mxu0 0.0
    %325 = vmatprep.subr.mxu0 0.0
    %326 = vmatpush1.msra.mxu0 0.0
    %327 = vmatprep.subr.mxu0 0.0
    %328 = vmatpush1.msra.mxu0 0.0
    %329 = vmatprep.subr.mxu0 0.0
    %330 = vmatpush1.msra.mxu0 0.0
    %331 = vmatprep.subr.mxu0 0.0
    %332 = vmatpush1.msra.mxu0 0.0
    %333 = vmatprep.subr.mxu0 0.0
    %334 = vmatpush1.msra.mxu0 0.0
    %335 = vmatprep.subr.mxu0 0.0
    %336 = vmatpush1.msra.mxu0 0.0
    %337 = vmatprep.subr.mxu0 0.0
    %338 = vmatpush1.msra.mxu0 0.0
    %339 = vmatprep.subr.mxu0 0.0
    %340 = vmatpush1.msra.mxu0 0.0
    %341 = vmatprep.subr.mxu0 0.0
    %342 = vmatpush1.msra.mxu0 0.0
    %343 = vmatprep.subr.mxu0 0.0
    %344 = vmatpush1.msra.mxu0 0.0
    %345 = vmatprep.subr.mxu0 0.0
    %346 = vmatpush1.msra.mxu0 0.0
    %347 = vmatprep.subr.mxu0 0.0
    %348 = vmatpush1.msra.mxu0 0.0
    %349 = vmatprep.subr.mxu0 0.0
    %350 = vmatpush1.msra.mxu0 0.0
    %351 = vmatprep.subr.mxu0 0.0
    %352 = vmatpush1.msra.mxu0 0.0
    %353 = vmatprep.subr.mxu0 0.0
    %354 = vmatpush1.msra.mxu0 0.0
    %355 = vmatprep.subr.mxu0 0.0
    %356 = vmatpush1.msra.mxu0 0.0
    %357 = vmatprep.subr.mxu0 0.0
    %358 = vmatpush1.msra.mxu0 0.0
    %359 = vmatprep.subr.mxu0 0.0
    %360 = vmatpush1.msra.mxu0 0.0
    %361 = vmatprep.subr.mxu0 0.0
    %362 = vmatpush1.msra.mxu0 0.0
    %363 = vmatprep.subr.mxu0 0.0
    %364 = vmatpush1.msra.mxu0 0.0
    %365 = vmatprep.subr.mxu0 0.0
    %366 = vmatpush1.msra.mxu0 0.0
    %367 = vmatprep.subr.mxu0 0.0
    %368 = vmatpush1.msra.mxu0 0.0
    %369 = vmatprep.subr.mxu0 0.0
    %370 = vmatpush1.msra.mxu0 0.0
    %371 = vmatprep.subr.mxu0 0.0
    %372 = vmatpush1.msra.mxu0 0.0
    %373 = vmatprep.subr.mxu0 0.0
    %374 = vmatpush1.msra.mxu0 0.0
    %375 = vmatprep.mubr.f32.mxu0 0.0
    %376 = vmatmul.mubr.f32.gmra.mrb[0].mxu0 %v309
    %v377 = vpop.f32.mrb[0].mxu0
    %v378 = vadd.f32 %v306, %v377
    %v379 = vpop.f32.mrb[0].mxu0
    %380 = vdwg.mxu0
    %vm381 = vcmask 31744
    %382 = vst.msk [vmem:[%s3] sm:$0xff] %vm381, %v378
    // Predicated region
    $region26: #{tpu_custom_call.1} parent=1 // pred_check
      _
    $region27: #{tpu_custom_call.1} parent=1 // pred_check_branch
      %384 = sbr.rel (0) target = $region29
    $region28: #{tpu_custom_call.1} parent=1 // pred_region
      _
    $region29: #{tpu_custom_call.1} parent=1 // pred_fallthru
      _
    // Predicated region
    $region30: #{tpu_custom_call.1} parent=1 // pred_check
      _
    $region31: #{tpu_custom_call.1} parent=1 // pred_check_branch
      %386 = sbr.rel (0) target = $region33
    $region32: #{tpu_custom_call.1} parent=1 // pred_region
      _
    $region33: #{tpu_custom_call.1} parent=1 // pred_fallthru
      _
    %387 = vsyncpa [#allocation3], 1
    %388 = vsyncpa [#allocation5], 1

</llo_original>
